<compile_context>
chip_gen: v7x
topology: tpu7x:2x2x1
jax: 0.10.0
libtpu: 0.0.40
codegen_flags: <defaults>
</compile_context>

<pallas_src>
import functools

import jax
import jax.numpy as jnp
from jax import lax
from jax.experimental import pallas as pl
from jax.experimental.pallas import tpu as pltpu


def _hyperconvt_kernel(x_ref, w_ref, rowf_ref, colf_ref, out_ref, patch_ref,
                       *, KS, CIN, COUT, WF, HFWF, MAXOFF, PATCH_W, EPS):
    KK = KS * KS

    # --- per-sample weight modulation + demodulation (all f32, VPU/EUP work) ---
    # w_ref: base kernel rearranged to (COUT, KK*CIN) with column = (kh*KS+kw)*CIN + cin
    w_mod = w_ref[...] * rowf_ref[0] * colf_ref[0]            # (COUT, KK*CIN)
    sq = jnp.sum(w_mod * w_mod, axis=0, keepdims=True)        # (1, KK*CIN)  sum over cout
    ss = sq[:, 0:CIN]                                         # group-sum over the KK taps
    for kk in range(1, KK):
        ss = ss + sq[:, kk * CIN:(kk + 1) * CIN]              # (1, CIN)
    d = lax.rsqrt(ss + EPS)                                   # per-cin demod factor (f32)
    d_full = jnp.concatenate([d] * KK, axis=1)                # (1, KK*CIN)
    w_bf = (w_mod * d_full).astype(jnp.bfloat16)              # bf16 MXU operand

    # --- im2col patch matrix: lane-aligned stores of lane-shifted reads --------
    # x_ref[0] is (CIN, W_EXT) bf16, row-padded + halo-padded in the wrapper so every
    # tap's slab is a full-width (CIN, PATCH_W) window (no masked partial stores).
    xv = x_ref[0]
    for kk in range(KK):
        kh, kw = kk // KS, kk % KS
        start = MAXOFF - (kh * WF + kw)
        patch_ref[kk * CIN:(kk + 1) * CIN, :] = xv[:, start:start + PATCH_W]

    # --- single fused MXU matmul; lane-dense output (COUT, HF*WF) --------------
    res = jnp.dot(w_bf, patch_ref[...], preferred_element_type=jnp.float32)  # (COUT, PATCH_W)
    out_ref[0] = res[:, :HFWF]


def hyper_conv_transpose2d(x_nchw, s, param, wcin, bcin, wcout, bcout, wkfc, bk,
                           *, padding=0, eps=1e-9):
    """x_nchw: (B, Cin, H, W);  s: (B, style) or (1, style);  param: (Cin, Cout, k, k)."""
    B, CIN, H, W = x_nchw.shape
    CIN2, COUT, KS, _ = param.shape
    assert CIN2 == CIN
    S = s.shape[-1]
    KK = KS * KS
    WF, HF = W + KS - 1, H + KS - 1
    HOUT, WOUT = HF - 2 * padding, WF - 2 * padding
    HWF_IN = H * WF                     # flattened (row-padded) input spatial
    HFWF = HF * WF                      # flattened full (un-cropped) output spatial
    MAXOFF = (KS - 1) * (WF + 1)        # largest flat-spatial shift of any tap
    PATCH_W = HWF_IN + MAXOFF           # patch-matrix width (covers every shifted window)
    W_EXT = HWF_IN + 2 * MAXOFF         # halo-padded x width

    if s.shape[0] == 1 and B > 1:
        s = jnp.broadcast_to(s, (B, S))
    s = s.astype(jnp.float32)

    # --- hyper-net FC layers hoisted out of the kernel (tiny batched matmuls) ---
    f_cin = 1.0 + s @ wcin + bcin[None, :]      # (B, CIN)
    f_cout = 1.0 + s @ wcout + bcout[None, :]   # (B, COUT)
    f_k = 1.0 + s @ wkfc + bk[None, :]          # (B, KK)
    row_fac = f_cout.reshape(B, COUT, 1)                                     # per-cout
    col_fac = (f_k[:, :, None] * f_cin[:, None, :]).reshape(B, 1, KK * CIN)  # per-(tap,cin)

    # base kernel rearranged to (COUT, KK*CIN): column = (kh*KS+kw)*CIN + cin
    param_r = jnp.transpose(param, (1, 2, 3, 0)).reshape(COUT, KK * CIN).astype(jnp.float32)

    # channels-first x, rows padded to WF (flat-spatial shifts become pure lane shifts),
    # then halo-padded by MAXOFF zeros on both sides; bf16 halves DMA + VMEM.
    x_rows = jnp.pad(x_nchw.astype(jnp.float32), ((0, 0), (0, 0), (0, 0), (0, KS - 1)))
    x_ext = jnp.pad(x_rows.reshape(B, CIN, HWF_IN), ((0, 0), (0, 0), (MAXOFF, MAXOFF)))
    x_ext = x_ext.astype(jnp.bfloat16)                                       # (B, CIN, W_EXT)

    kernel = functools.partial(_hyperconvt_kernel, KS=KS, CIN=CIN, COUT=COUT, WF=WF,
                               HFWF=HFWF, MAXOFF=MAXOFF, PATCH_W=PATCH_W, EPS=eps)

    out_flat = pl.pallas_call(
        kernel,
        out_shape=jax.ShapeDtypeStruct((B, COUT, HFWF), jnp.float32),
        grid_spec=pltpu.PrefetchScalarGridSpec(
            num_scalar_prefetch=0,
            grid=(B,),
            in_specs=[
                pl.BlockSpec((1, CIN, W_EXT), lambda b: (b, 0, 0)),       # x (halo-padded)
                pl.BlockSpec((COUT, KK * CIN), lambda b: (0, 0)),         # base kernel
                pl.BlockSpec((1, COUT, 1), lambda b: (b, 0, 0)),          # (1+f_cout)
                pl.BlockSpec((1, 1, KK * CIN), lambda b: (b, 0, 0)),      # (1+f_k)*(1+f_cin)
            ],
            out_specs=pl.BlockSpec((1, COUT, HFWF), lambda b: (b, 0, 0)),
            scratch_shapes=[pltpu.VMEM((KK * CIN, PATCH_W), jnp.bfloat16)],
        ),
        compiler_params=pltpu.CompilerParams(dimension_semantics=("parallel",)),
    )(x_ext, param_r, row_fac, col_fac)

    out = out_flat.reshape(B, COUT, HF, WF)
    if padding:
        out = out[:, :, padding:padding + HOUT, padding:padding + WOUT]
    return out


def _reference(x, s, param, wcin, bcin, wcout, bcout, wkfc, bk, *, padding=0, eps=1e-9):
    """Pure-JAX reference matching the PyTorch forward (per-sample loop).

    x and the final modulated weights are rounded to bf16 (and back to f32) to match the
    kernel's bf16 MXU operands; accumulation stays in f32 in both paths.
    """
    B = x.shape[0]
    CIN, COUT, KS, _ = param.shape
    if s.shape[0] == 1 and B > 1:
        s = jnp.broadcast_to(s, (B, s.shape[-1]))
    outs = []
    for i in range(B):
        si = s[i:i + 1]
        f_cin = si @ wcin + bcin[None, :]
        f_cout = si @ wcout + bcout[None, :]
        f_k = (si @ wkfc + bk[None, :]).reshape(KS, KS)
        w = (param
             * (1.0 + f_cin)[0][:, None, None, None]
             * (1.0 + f_cout)[0][None, :, None, None]
             * (1.0 + f_k)[None, None, :, :])
        d = lax.rsqrt(jnp.sum(w * w, axis=(1, 2, 3), keepdims=True) + eps)
        w = (w * d).astype(jnp.bfloat16).astype(jnp.float32)
        xi = x[i:i + 1].astype(jnp.bfloat16).astype(jnp.float32)
        # conv_transpose2d(stride=1, pad=p) == conv2d with flipped/transposed kernel, pad k-1-p
        w2 = jnp.transpose(jnp.flip(w, axis=(2, 3)), (1, 0, 2, 3))     # (COUT, CIN, k, k)
        y = lax.conv_general_dilated(
            xi, w2, window_strides=(1, 1),
            padding=[(KS - 1 - padding, KS - 1 - padding)] * 2,
            dimension_numbers=('NCHW', 'OIHW', 'NCHW'))
        outs.append(y)
    return jnp.concatenate(outs, axis=0)


if __name__ == "__main__":
    B, S, CIN, COUT, KS, H, W = 2, 32, 4, 8, 3, 16, 16
    PAD = 0

    ks = jax.random.split(jax.random.PRNGKey(0), 9)
    x = jax.random.normal(ks[0], (B, CIN, H, W), jnp.float32)
    style = jax.random.normal(ks[1], (B, S), jnp.float32)

    # deterministic synthetic parameters (shapes from hyperConvTranspose.__init__)
    fan_in = COUT * KS * KS
    param = jax.random.normal(ks[2], (CIN, COUT, KS, KS), jnp.float32) * (2.0 / fan_in) ** 0.5
    wcin = jax.random.normal(ks[3], (S, CIN), jnp.float32) * 0.1
    bcin = jax.random.normal(ks[4], (CIN,), jnp.float32) * 0.1
    wcout = jax.random.normal(ks[5], (S, COUT), jnp.float32) * 0.1
    bcout = jax.random.normal(ks[6], (COUT,), jnp.float32) * 0.1
    wkfc = jax.random.normal(ks[7], (S, KS * KS), jnp.float32) * 0.1
    bk = jax.random.normal(ks[8], (KS * KS,), jnp.float32) * 0.1

    out = hyper_conv_transpose2d(x, style, param, wcin, bcin, wcout, bcout, wkfc, bk,
                                 padding=PAD, eps=1e-9)
    out = jax.block_until_ready(out)

    ref = _reference(x, style, param, wcin, bcin, wcout, bcout, wkfc, bk,
                     padding=PAD, eps=1e-9)
    assert out.shape == (B, COUT, H + KS - 1 - 2 * PAD, W + KS - 1 - 2 * PAD), out.shape
    err = float(jnp.max(jnp.abs(out - ref)))
    assert err < 5e-3, f"max abs error {err}"
    print("KERNEL_OK")
</pallas_src>

<mosaic_0001>
module attributes {stable_mosaic.version = 11 : i64} {
  func.func @_hyperconvt_kernel(%arg0: i32, %arg1: memref<1x4x364xbf16, #tpu.memory_space<vmem>>, %arg2: memref<8x36xf32, #tpu.memory_space<vmem>>, %arg3: memref<1x8x1xf32, #tpu.memory_space<vmem>>, %arg4: memref<1x1x36xf32, #tpu.memory_space<vmem>>, %arg5: memref<1x8x324xf32, #tpu.memory_space<vmem>>, %arg6: memref<36x326xbf16, #tpu.memory_space<vmem>>) attributes {dimension_semantics = [#tpu.dimension_semantics<parallel>], iteration_bounds = array<i64: 2>, scalar_prefetch = 0 : i64, scratch_operands = 1 : i64, tpu.core_type = #tpu.core_type<tc>, window_params = [{transform_indices = @transform_0, window_bounds = array<i64: 1, 4, 364>}, {pipeline_mode = #tpu.pipeline_mode<synchronous>, transform_indices = @transform_1, window_bounds = array<i64: 8, 36>}, {transform_indices = @transform_2, window_bounds = array<i64: 1, 8, 1>}, {transform_indices = @transform_3, window_bounds = array<i64: 1, 1, 36>}, {transform_indices = @transform_4, window_bounds = array<i64: 1, 8, 324>}]} {
    %c0 = arith.constant 0 : index
    %c0_0 = arith.constant 0 : index
    %0 = vector.load %arg2[%c0, %c0_0] : memref<8x36xf32, #tpu.memory_space<vmem>>, vector<8x36xf32>
    %c0_1 = arith.constant 0 : index
    %c0_2 = arith.constant 0 : index
    %c0_3 = arith.constant 0 : index
    %1 = vector.load %arg3[%c0_1, %c0_2, %c0_3] : memref<1x8x1xf32, #tpu.memory_space<vmem>>, vector<1x8x1xf32>
    %2 = vector.shape_cast %1 : vector<1x8x1xf32> to vector<8x1xf32>
    %3 = vector.broadcast %2 : vector<8x1xf32> to vector<8x36xf32>
    %4 = arith.mulf %0, %3 : vector<8x36xf32>
    %c0_4 = arith.constant 0 : index
    %c0_5 = arith.constant 0 : index
    %c0_6 = arith.constant 0 : index
    %5 = vector.load %arg4[%c0_4, %c0_5, %c0_6] : memref<1x1x36xf32, #tpu.memory_space<vmem>>, vector<1x1x36xf32>
    %6 = vector.shape_cast %5 : vector<1x1x36xf32> to vector<1x36xf32>
    %7 = vector.broadcast %6 : vector<1x36xf32> to vector<8x36xf32>
    %8 = arith.mulf %4, %7 : vector<8x36xf32>
    %9 = arith.mulf %8, %8 : vector<8x36xf32>
    %cst = arith.constant dense<0.000000e+00> : vector<36xf32>
    %10 = vector.multi_reduction <add>, %9, %cst [0] : vector<8x36xf32> to vector<36xf32>
    %11 = vector.shape_cast %10 : vector<36xf32> to vector<1x36xf32>
    %12 = vector.extract_strided_slice %11 {offsets = [0, 0], sizes = [1, 4], strides = [1, 1]} : vector<1x36xf32> to vector<1x4xf32>
    %13 = vector.extract_strided_slice %11 {offsets = [0, 4], sizes = [1, 4], strides = [1, 1]} : vector<1x36xf32> to vector<1x4xf32>
    %14 = arith.addf %12, %13 : vector<1x4xf32>
    %15 = vector.extract_strided_slice %11 {offsets = [0, 8], sizes = [1, 4], strides = [1, 1]} : vector<1x36xf32> to vector<1x4xf32>
    %16 = arith.addf %14, %15 : vector<1x4xf32>
    %17 = vector.extract_strided_slice %11 {offsets = [0, 12], sizes = [1, 4], strides = [1, 1]} : vector<1x36xf32> to vector<1x4xf32>
    %18 = arith.addf %16, %17 : vector<1x4xf32>
    %19 = vector.extract_strided_slice %11 {offsets = [0, 16], sizes = [1, 4], strides = [1, 1]} : vector<1x36xf32> to vector<1x4xf32>
    %20 = arith.addf %18, %19 : vector<1x4xf32>
    %21 = vector.extract_strided_slice %11 {offsets = [0, 20], sizes = [1, 4], strides = [1, 1]} : vector<1x36xf32> to vector<1x4xf32>
    %22 = arith.addf %20, %21 : vector<1x4xf32>
    %23 = vector.extract_strided_slice %11 {offsets = [0, 24], sizes = [1, 4], strides = [1, 1]} : vector<1x36xf32> to vector<1x4xf32>
    %24 = arith.addf %22, %23 : vector<1x4xf32>
    %25 = vector.extract_strided_slice %11 {offsets = [0, 28], sizes = [1, 4], strides = [1, 1]} : vector<1x36xf32> to vector<1x4xf32>
    %26 = arith.addf %24, %25 : vector<1x4xf32>
    %27 = vector.extract_strided_slice %11 {offsets = [0, 32], sizes = [1, 4], strides = [1, 1]} : vector<1x36xf32> to vector<1x4xf32>
    %28 = arith.addf %26, %27 : vector<1x4xf32>
    %cst_7 = arith.constant 9.99999971E-10 : f32
    %29 = vector.broadcast %cst_7 : f32 to vector<1x4xf32>
    %30 = arith.addf %28, %29 : vector<1x4xf32>
    %31 = math.rsqrt %30 : vector<1x4xf32>
    %32 = tpu.concatenate %31, %31, %31, %31, %31, %31, %31, %31, %31 in 1 : vector<1x4xf32>, vector<1x4xf32>, vector<1x4xf32>, vector<1x4xf32>, vector<1x4xf32>, vector<1x4xf32>, vector<1x4xf32>, vector<1x4xf32>, vector<1x4xf32> -> vector<1x36xf32>
    %33 = vector.broadcast %32 : vector<1x36xf32> to vector<8x36xf32>
    %34 = arith.mulf %8, %33 : vector<8x36xf32>
    %35 = arith.truncf %34 : vector<8x36xf32> to vector<8x36xbf16>
    %c0_8 = arith.constant 0 : index
    %c0_9 = arith.constant 0 : index
    %c0_10 = arith.constant 0 : index
    %36 = vector.load %arg1[%c0_8, %c0_9, %c0_10] : memref<1x4x364xbf16, #tpu.memory_space<vmem>>, vector<1x4x364xbf16>
    %37 = vector.shape_cast %36 : vector<1x4x364xbf16> to vector<4x364xbf16>
    %38 = vector.extract_strided_slice %37 {offsets = [0, 38], sizes = [4, 326], strides = [1, 1]} : vector<4x364xbf16> to vector<4x326xbf16>
    %c0_11 = arith.constant 0 : index
    %c0_12 = arith.constant 0 : index
    %39 = vector.load %arg6[%c0_11, %c0_12] : memref<36x326xbf16, #tpu.memory_space<vmem>>, vector<4x326xbf16>
    tpu.vector_store %arg6[%c0_11, %c0_12], %38 {strides = array<i32>} : memref<36x326xbf16, #tpu.memory_space<vmem>>, vector<4x326xbf16>,
    %40 = vector.extract_strided_slice %37 {offsets = [0, 37], sizes = [4, 326], strides = [1, 1]} : vector<4x364xbf16> to vector<4x326xbf16>
    %c4 = arith.constant 4 : index
    %c0_13 = arith.constant 0 : index
    %41 = vector.load %arg6[%c4, %c0_13] : memref<36x326xbf16, #tpu.memory_space<vmem>>, vector<4x326xbf16>
    tpu.vector_store %arg6[%c4, %c0_13], %40 {strides = array<i32>} : memref<36x326xbf16, #tpu.memory_space<vmem>>, vector<4x326xbf16>,
    %42 = vector.extract_strided_slice %37 {offsets = [0, 36], sizes = [4, 326], strides = [1, 1]} : vector<4x364xbf16> to vector<4x326xbf16>
    %c8 = arith.constant 8 : index
    %c0_14 = arith.constant 0 : index
    %43 = vector.load %arg6[%c8, %c0_14] : memref<36x326xbf16, #tpu.memory_space<vmem>>, vector<4x326xbf16>
    tpu.vector_store %arg6[%c8, %c0_14], %42 {strides = array<i32>} : memref<36x326xbf16, #tpu.memory_space<vmem>>, vector<4x326xbf16>,
    %44 = vector.extract_strided_slice %37 {offsets = [0, 20], sizes = [4, 326], strides = [1, 1]} : vector<4x364xbf16> to vector<4x326xbf16>
    %c12 = arith.constant 12 : index
    %c0_15 = arith.constant 0 : index
    %45 = vector.load %arg6[%c12, %c0_15] : memref<36x326xbf16, #tpu.memory_space<vmem>>, vector<4x326xbf16>
    tpu.vector_store %arg6[%c12, %c0_15], %44 {strides = array<i32>} : memref<36x326xbf16, #tpu.memory_space<vmem>>, vector<4x326xbf16>,
    %46 = vector.extract_strided_slice %37 {offsets = [0, 19], sizes = [4, 326], strides = [1, 1]} : vector<4x364xbf16> to vector<4x326xbf16>
    %c16 = arith.constant 16 : index
    %c0_16 = arith.constant 0 : index
    %47 = vector.load %arg6[%c16, %c0_16] : memref<36x326xbf16, #tpu.memory_space<vmem>>, vector<4x326xbf16>
    tpu.vector_store %arg6[%c16, %c0_16], %46 {strides = array<i32>} : memref<36x326xbf16, #tpu.memory_space<vmem>>, vector<4x326xbf16>,
    %48 = vector.extract_strided_slice %37 {offsets = [0, 18], sizes = [4, 326], strides = [1, 1]} : vector<4x364xbf16> to vector<4x326xbf16>
    %c20 = arith.constant 20 : index
    %c0_17 = arith.constant 0 : index
    %49 = vector.load %arg6[%c20, %c0_17] : memref<36x326xbf16, #tpu.memory_space<vmem>>, vector<4x326xbf16>
    tpu.vector_store %arg6[%c20, %c0_17], %48 {strides = array<i32>} : memref<36x326xbf16, #tpu.memory_space<vmem>>, vector<4x326xbf16>,
    %50 = vector.extract_strided_slice %37 {offsets = [0, 2], sizes = [4, 326], strides = [1, 1]} : vector<4x364xbf16> to vector<4x326xbf16>
    %c24 = arith.constant 24 : index
    %c0_18 = arith.constant 0 : index
    %51 = vector.load %arg6[%c24, %c0_18] : memref<36x326xbf16, #tpu.memory_space<vmem>>, vector<4x326xbf16>
    tpu.vector_store %arg6[%c24, %c0_18], %50 {strides = array<i32>} : memref<36x326xbf16, #tpu.memory_space<vmem>>, vector<4x326xbf16>,
    %52 = vector.extract_strided_slice %37 {offsets = [0, 1], sizes = [4, 326], strides = [1, 1]} : vector<4x364xbf16> to vector<4x326xbf16>
    %c28 = arith.constant 28 : index
    %c0_19 = arith.constant 0 : index
    %53 = vector.load %arg6[%c28, %c0_19] : memref<36x326xbf16, #tpu.memory_space<vmem>>, vector<4x326xbf16>
    tpu.vector_store %arg6[%c28, %c0_19], %52 {strides = array<i32>} : memref<36x326xbf16, #tpu.memory_space<vmem>>, vector<4x326xbf16>,
    %54 = vector.extract_strided_slice %37 {offsets = [0, 0], sizes = [4, 326], strides = [1, 1]} : vector<4x364xbf16> to vector<4x326xbf16>
    %c32 = arith.constant 32 : index
    %c0_20 = arith.constant 0 : index
    %55 = vector.load %arg6[%c32, %c0_20] : memref<36x326xbf16, #tpu.memory_space<vmem>>, vector<4x326xbf16>
    tpu.vector_store %arg6[%c32, %c0_20], %54 {strides = array<i32>} : memref<36x326xbf16, #tpu.memory_space<vmem>>, vector<4x326xbf16>,
    %c0_21 = arith.constant 0 : index
    %c0_22 = arith.constant 0 : index
    %56 = vector.load %arg6[%c0_21, %c0_22] : memref<36x326xbf16, #tpu.memory_space<vmem>>, vector<36x326xbf16>
    %cst_23 = arith.constant dense<0.000000e+00> : vector<8x326xf32>
    %57 = tpu.matmul %35, %56, %cst_23 {dimension_numbers = #tpu.dot_dimension_numbers<[1], [0], [0], [1], [0, 0, 1, 1], [], []>} : vector<8x36xbf16>, vector<36x326xbf16>, vector<8x326xf32> -> vector<8x326xf32>
    %58 = vector.extract_strided_slice %57 {offsets = [0, 0], sizes = [8, 324], strides = [1, 1]} : vector<8x326xf32> to vector<8x324xf32>
    %c0_24 = arith.constant 0 : index
    %c0_25 = arith.constant 0 : index
    %c0_26 = arith.constant 0 : index
    %59 = vector.load %arg5[%c0_24, %c0_25, %c0_26] : memref<1x8x324xf32, #tpu.memory_space<vmem>>, vector<1x8x324xf32>
    %60 = vector.shape_cast %59 : vector<1x8x324xf32> to vector<8x324xf32>
    %61 = vector.shape_cast %58 : vector<8x324xf32> to vector<1x8x324xf32>
    tpu.vector_store %arg5[%c0_24, %c0_25, %c0_26], %61 {strides = array<i32>} : memref<1x8x324xf32, #tpu.memory_space<vmem>>, vector<1x8x324xf32>,
    return
  }
  func.func @transform_0(%arg0: i32) -> (i32, i32, i32) {
    %c0_i32 = arith.constant 0 : i32
    %c0_i32_0 = arith.constant 0 : i32
    %c0_i32_1 = arith.constant 0 : i32
    return %arg0, %c0_i32, %c0_i32_0 : i32, i32, i32
  }
  func.func @transform_1(%arg0: i32) -> (i32, i32) {
    %c0_i32 = arith.constant 0 : i32
    %c0_i32_0 = arith.constant 0 : i32
    %c0_i32_1 = arith.constant 0 : i32
    return %c0_i32, %c0_i32_0 : i32, i32
  }
  func.func @transform_2(%arg0: i32) -> (i32, i32, i32) {
    %c0_i32 = arith.constant 0 : i32
    %c0_i32_0 = arith.constant 0 : i32
    %c0_i32_1 = arith.constant 0 : i32
    return %arg0, %c0_i32, %c0_i32_0 : i32, i32, i32
  }
  func.func @transform_3(%arg0: i32) -> (i32, i32, i32) {
    %c0_i32 = arith.constant 0 : i32
    %c0_i32_0 = arith.constant 0 : i32
    %c0_i32_1 = arith.constant 0 : i32
    return %arg0, %c0_i32, %c0_i32_0 : i32, i32, i32
  }
  func.func @transform_4(%arg0: i32) -> (i32, i32, i32) {
    %c0_i32 = arith.constant 0 : i32
    %c0_i32_0 = arith.constant 0 : i32
    %c0_i32_1 = arith.constant 0 : i32
    return %arg0, %c0_i32, %c0_i32_0 : i32, i32, i32
  }
}

</mosaic_0001>

<llo_original>
// kernel: tpu_custom_call.1
$region0: #{tpu_custom_call.1}
  #allocation0 [shape = 'u32[]', space=smem, size = 0x4, offset = 0x4, fixed_abs, tag = 'smem constant byte address 0x4 - core index']
  #allocation1 [shape = 'u32[144,128]{1,0:T(1,128)}', space=vmem, size = 0x12000, scoped, tag = 'internal scratch']
  #allocation2 [shape = 'bf16[36,326]{1,0:T(8,128)(2,1)}', space=vmem, size = 0x7800, scoped, tag = 'scratch operand']
  %s0 = inlined_call_operand.vmem [shape: bf16[2,4,364], index: 0, kind: input, shape index: {}]
  %s1 = inlined_call_operand.vmem [shape: f32[8,36], index: 1, kind: input, shape index: {}]
  %s2 = inlined_call_operand.vmem [shape: f32[2,8,1], index: 2, kind: input, shape index: {}]
  %s3 = inlined_call_operand.vmem [shape: f32[2,1,36], index: 3, kind: input, shape index: {}]
  %s4 = inlined_call_operand.hbm [shape: f32[2,8,324], index: 4, kind: output, shape index: {}]
  %s5 = sld [smem:[#allocation0]]
  $region49: #{tpu_custom_call.1} parent=0
    _
  %s7 = ssub.s32 1, %s5
  %s8 = scalar_select 0, %s7, %s5
  $region1: #{tpu_custom_call.1} parent=0
    #allocation3 [shape = 'u8[24576]{0}', space=vmem, size = 0x6000, scoped, tag = 'output window, operand 0']
    #allocation4 [shape = 's32[2]{0}', space=sflag, size = 0x8, scoped, tag = 'scoped memory for tpu_custom_call.1']
    %9 = vsyncpa [#allocation4], 0
    %s10 = scalar_lea.sflag [#allocation4], 1
    %11 = vsyncpa %s10, 0
    loop: start=0, step=1, limit=4
    $region2: #{tpu_custom_call.1} parent=1 // loop_pre_header
      _
    $region3: #{tpu_custom_call.1} parent=1 // loop_header
      %s13 = sphi 0, %s17
      %p14 = scmp.ge.s32.totalorder %s13, 4
      %s23 = sphi 0, %s25
      %s26 = sphi 0, %s23
      %s27 = sphi 0, %s26
      %s43 = sphi 0, %s27
      %s47 = sphi 0, %s47
      %s49 = sphi 0, %s47
      %s50 = sphi 0, %s49
      %s64 = sphi 0, %s50
      %s70 = sphi 0, %s72
      %s73 = sphi 0, %s70
      %s74 = sphi 0, %s73
      %s90 = sphi 0, %s74
      %s96 = sphi 0, %s98
      %s99 = sphi 0, %s96
      %s100 = sphi 0, %s99
      %s116 = sphi 0, %s100
      %s122 = sphi 0, %s124
      %s125 = sphi 0, %s122
      %s126 = sphi 0, %s125
      %s142 = sphi 0, %s126
    $region4: #{tpu_custom_call.1} parent=1 // loop_header_branch
      %16 = sbr.rel (%p14) target = $region8
    $region5: #{tpu_custom_call.1} parent=1 // loop_body
      %s18 = ssub.s32 %s13, 1
      %s19 = ssub.s32 %s13, 2
      %s20 = sadd.s32 %s13, 1
      %s21 = ssub.s32 %s13, %s20
      %p22 = scmp.eq.s32.totalorder %s21, 0
      %s24 = sadd.s32 %s23, 1
      %s25 = scalar_select %p22, %s23, %s24
      %p28 = pneg %p22
      %p29 = scmp.eq.s32.totalorder %s13, 1
      %p30 = por %p28, %p29
      %p31 = scmp.ne.s32.totalorder %s23, %s26
      %p32 = scmp.eq.s32.totalorder %s13, 0
      %p33 = por %p31, %p32
      %p34 = scmp.ne.s32.totalorder %s23, %s26
      %p35 = scmp.eq.s32.totalorder %s18, 1
      %p36 = por %p34, %p35
      %p37 = scmp.ne.s32.totalorder %s26, %s27
      %p38 = scmp.eq.s32.totalorder %s18, 0
      %p39 = por %p37, %p38
      %p40 = scmp.ne.s32.totalorder %s26, %s27
      %p41 = scmp.eq.s32.totalorder %s19, 1
      %p42 = por %p40, %p41
      %p44 = scmp.ne.s32.totalorder %s27, %s43
      %p45 = scmp.eq.s32.totalorder %s19, 0
      %p46 = por %p44, %p45
      %s48 = sadd.s32 %s47, 1
      %p51 = scmp.eq.s32.totalorder %s13, 1
      %p52 = scmp.ne.s32.totalorder %s47, %s49
      %p53 = scmp.eq.s32.totalorder %s13, 0
      %p54 = por %p52, %p53
      %p55 = scmp.ne.s32.totalorder %s47, %s49
      %p56 = scmp.eq.s32.totalorder %s18, 1
      %p57 = por %p55, %p56
      %p58 = scmp.ne.s32.totalorder %s49, %s50
      %p59 = scmp.eq.s32.totalorder %s18, 0
      %p60 = por %p58, %p59
      %p61 = scmp.ne.s32.totalorder %s49, %s50
      %p62 = scmp.eq.s32.totalorder %s19, 1
      %p63 = por %p61, %p62
      %p65 = scmp.ne.s32.totalorder %s50, %s64
      %p66 = scmp.eq.s32.totalorder %s19, 0
      %p67 = por %p65, %p66
      %s68 = ssub.s32 %s13, %s20
      %p69 = scmp.eq.s32.totalorder %s68, 0
      %s71 = sadd.s32 %s70, 1
      %s72 = scalar_select %p69, %s70, %s71
      %p75 = pneg %p69
      %p76 = scmp.eq.s32.totalorder %s13, 1
      %p77 = por %p75, %p76
      %p78 = scmp.ne.s32.totalorder %s70, %s73
      %p79 = scmp.eq.s32.totalorder %s13, 0
      %p80 = por %p78, %p79
      %p81 = scmp.ne.s32.totalorder %s70, %s73
      %p82 = scmp.eq.s32.totalorder %s18, 1
      %p83 = por %p81, %p82
      %p84 = scmp.ne.s32.totalorder %s73, %s74
      %p85 = scmp.eq.s32.totalorder %s18, 0
      %p86 = por %p84, %p85
      %p87 = scmp.ne.s32.totalorder %s73, %s74
      %p88 = scmp.eq.s32.totalorder %s19, 1
      %p89 = por %p87, %p88
      %p91 = scmp.ne.s32.totalorder %s74, %s90
      %p92 = scmp.eq.s32.totalorder %s19, 0
      %p93 = por %p91, %p92
      %s94 = ssub.s32 %s13, %s20
      %p95 = scmp.eq.s32.totalorder %s94, 0
      %s97 = sadd.s32 %s96, 1
      %s98 = scalar_select %p95, %s96, %s97
      %p101 = pneg %p95
      %p102 = scmp.eq.s32.totalorder %s13, 1
      %p103 = por %p101, %p102
      %p104 = scmp.ne.s32.totalorder %s96, %s99
      %p105 = scmp.eq.s32.totalorder %s13, 0
      %p106 = por %p104, %p105
      %p107 = scmp.ne.s32.totalorder %s96, %s99
      %p108 = scmp.eq.s32.totalorder %s18, 1
      %p109 = por %p107, %p108
      %p110 = scmp.ne.s32.totalorder %s99, %s100
      %p111 = scmp.eq.s32.totalorder %s18, 0
      %p112 = por %p110, %p111
      %p113 = scmp.ne.s32.totalorder %s99, %s100
      %p114 = scmp.eq.s32.totalorder %s19, 1
      %p115 = por %p113, %p114
      %p117 = scmp.ne.s32.totalorder %s100, %s116
      %p118 = scmp.eq.s32.totalorder %s19, 0
      %p119 = por %p117, %p118
      %s120 = ssub.s32 %s13, %s20
      %p121 = scmp.eq.s32.totalorder %s120, 0
      %s123 = sadd.s32 %s122, 1
      %s124 = scalar_select %p121, %s122, %s123
      %p127 = pneg %p121
      %p128 = scmp.eq.s32.totalorder %s13, 1
      %p129 = por %p127, %p128
      %p130 = scmp.ne.s32.totalorder %s122, %s125
      %p131 = scmp.eq.s32.totalorder %s13, 0
      %p132 = por %p130, %p131
      %p133 = scmp.ne.s32.totalorder %s122, %s125
      %p134 = scmp.eq.s32.totalorder %s18, 1
      %p135 = por %p133, %p134
      %p136 = scmp.ne.s32.totalorder %s125, %s126
      %p137 = scmp.eq.s32.totalorder %s18, 0
      %p138 = por %p136, %p137
      %p139 = scmp.ne.s32.totalorder %s125, %s126
      %p140 = scmp.eq.s32.totalorder %s19, 1
      %p141 = por %p139, %p140
      %p143 = scmp.ne.s32.totalorder %s126, %s142
      %p144 = scmp.eq.s32.totalorder %s19, 0
      %p145 = por %p143, %p144
      %p146 = scmp.le.s32.totalorder 1, %s13
      %p147 = scmp.lt.s32.totalorder %s13, 3
      %p148 = pnand %p146, %p147
      %p149 = pneg %p148
      // Predicated region
      $region9: #{tpu_custom_call.1} parent=5 // pred_check
        _
      $region10: #{tpu_custom_call.1} parent=5 // pred_check_branch
        %151 = sbr.rel (%p148) target = $region12
      $region11: #{tpu_custom_call.1} parent=5 // pred_region
        %s152 = ssub.s32 %s13, 1
        // Predicated region
        $region13: #{tpu_custom_call.1} parent=11 // pred_check
          %p153 = pneg %p60
        $region14: #{tpu_custom_call.1} parent=11 // pred_check_branch
          %155 = sbr.rel (%p153) target = $region16
        $region15: #{tpu_custom_call.1} parent=11 // pred_region
          _
        $region16: #{tpu_custom_call.1} parent=11 // pred_fallthru
          _
      $region12: #{tpu_custom_call.1} parent=5 // pred_fallthru
        _
      %p156 = scmp.lt.s32.totalorder %s13, 2
      // Predicated region
      $region17: #{tpu_custom_call.1} parent=5 // pred_check
        %p157 = pneg %p156
      $region18: #{tpu_custom_call.1} parent=5 // pred_check_branch
        %159 = sbr.rel (%p157) target = $region20
      $region19: #{tpu_custom_call.1} parent=5 // pred_region
        // Predicated region
        $region21: #{tpu_custom_call.1} parent=19 // pred_check
          %p160 = pneg %p33
        $region22: #{tpu_custom_call.1} parent=19 // pred_check_branch
          %162 = sbr.rel (%p160) target = $region24
        $region23: #{tpu_custom_call.1} parent=19 // pred_region
          %p163 = scmp.lt.s32.totalorder %s13, 1
          %s164 = scalar_select %p163, %s13, 1
          %s165 = smul.addr %s164, 3
          %s166 = smul.addr %s165, 2
          %s167 = scalar_lea.vmem %s0, %s166
        $region24: #{tpu_custom_call.1} parent=19 // pred_fallthru
          _
        // Predicated region
        $region25: #{tpu_custom_call.1} parent=19 // pred_check
          %p168 = pneg %p80
        $region26: #{tpu_custom_call.1} parent=19 // pred_check_branch
          %170 = sbr.rel (%p168) target = $region28
        $region27: #{tpu_custom_call.1} parent=19 // pred_region
          %p171 = scmp.lt.s32.totalorder %s13, 1
          %s172 = scalar_select %p171, %s13, 1
          %s173 = smul.addr %s172, 8
          %s174 = scalar_lea.vmem %s2, %s173
        $region28: #{tpu_custom_call.1} parent=19 // pred_fallthru
          _
        // Predicated region
        $region29: #{tpu_custom_call.1} parent=19 // pred_check
          %p175 = pneg %p106
        $region30: #{tpu_custom_call.1} parent=19 // pred_check_branch
          %177 = sbr.rel (%p175) target = $region32
        $region31: #{tpu_custom_call.1} parent=19 // pred_region
          %p178 = scmp.lt.s32.totalorder %s13, 1
          %s179 = scalar_select %p178, %s13, 1
          %s180 = scalar_lea.vmem %s3, %s179
        $region32: #{tpu_custom_call.1} parent=19 // pred_fallthru
          _
      $region20: #{tpu_custom_call.1} parent=5 // pred_fallthru
        _
      %p181 = scmp.le.s32.totalorder 1, %s13
      %p182 = scmp.lt.s32.totalorder %s13, 3
      %p183 = pnand %p181, %p182
      %p184 = pneg %p183
      // Predicated region
      $region33: #{tpu_custom_call.1} parent=5 // pred_check
        _
      $region34: #{tpu_custom_call.1} parent=5 // pred_check_branch
        %186 = sbr.rel (%p183) target = $region36
      $region35: #{tpu_custom_call.1} parent=5 // pred_region
        %s187 = ssub.s32 %s13, 1
        %p188 = scmp.lt.s32.totalorder %s18, 1
        %s189 = scalar_select %p188, %s18, 1
        %s190 = smul.addr %s189, 3
        %s191 = smul.addr %s190, 2
        %s192 = scalar_lea.vmem %s0, %s191
        %p193 = pneg %p39
        %p194 = pneg %p36
        %p195 = pneg %p60
        %p196 = pneg %p57
        %p197 = scmp.lt.s32.totalorder %s18, 1
        %s198 = scalar_select %p197, %s18, 1
        %s199 = smul.addr %s198, 8
        %s200 = scalar_lea.vmem %s2, %s199
        %p201 = pneg %p86
        %p202 = pneg %p83
        %p203 = scmp.lt.s32.totalorder %s18, 1
        %s204 = scalar_select %p203, %s18, 1
        %s205 = scalar_lea.vmem %s3, %s204
        %p206 = pneg %p112
        %p207 = pneg %p109
        %p208 = pneg %p138
        %p209 = pneg %p135
        %s210 = sand.u32 %s125, 1
        %s211 = scalar_lea.sflag [#allocation4], %s210
        %s212 = sand.u32 %s125, 1
        %s213 = smul.addr %s212, 24
        %s214 = scalar_lea.vmem [#allocation3], %s213
        %p215 = scmp.lt.s32.totalorder %s18, 1
        %s216 = scalar_select %p215, %s18, 1
        %s217 = smul.addr %s216, 3
        %s218 = smul.addr %s217, 2
        %s219 = scalar_lea.vmem %s0, %s218
        %p220 = scmp.lt.s32.totalorder %s18, 1
        %s221 = scalar_select %p220, %s18, 1
        %s222 = smul.addr %s221, 8
        %s223 = scalar_lea.vmem %s2, %s222
        %p224 = scmp.lt.s32.totalorder %s18, 1
        %s225 = scalar_select %p224, %s18, 1
        %s226 = scalar_lea.vmem %s3, %s225
        %v228 = vld [vmem:[%s1] sm:$0xff]
        %v229 = vld [vmem:[%s223] sm:$0xff]
        %231 = vset.pattern.permute.xlu0 0
        %232 = vperm.xlu0 %231, %v229
        %v233 = vpop.permute.xlu0 %232
        %v235 = vmul.f32 %v228, %v233
        %v236 = vld [vmem:[%s226] sm:$0x1]
        %v238 = vlaneseq
        %v239 = vshrl.u32 %v238, 7
        %v240 = vsub.s32 0, %v239
        %v241 = vrot.slane %v236, %v240
        %v243 = vmul.f32 %v235, %v241
        %v244 = vmul.f32 %v243, %v243
        %vm245 = vcmask 293888
        %v246 = vsel %vm245, %v244, 0.0
        %v247 = vrot.slane %v246, 4
        %v248 = vadd.f32 %v246, %v247
        %v249 = vrot.slane %v248, 2
        %v250 = vadd.f32 %v248, %v249
        %v251 = vrot.slane %v250, 1
        %v252 = vadd.f32 %v250, %v251
        %254 = vrot.lane.b32.xlu0 %v252, 124
        %v255 = vpop.permute.xlu0 %254
        %v257 = vadd.f32 %v252, %v255
        %258 = vrot.lane.b32.xlu0 %v252, 120
        %v259 = vpop.permute.xlu0 %258
        %v261 = vadd.f32 %v257, %v259
        %262 = vrot.lane.b32.xlu0 %v252, 116
        %v263 = vpop.permute.xlu0 %262
        %v265 = vadd.f32 %v261, %v263
        %266 = vrot.lane.b32.xlu0 %v252, 112
        %v267 = vpop.permute.xlu0 %266
        %v269 = vadd.f32 %v265, %v267
        %270 = vrot.lane.b32.xlu0 %v252, 108
        %v271 = vpop.permute.xlu0 %270
        %v273 = vadd.f32 %v269, %v271
        %274 = vrot.lane.b32.xlu0 %v252, 104
        %v275 = vpop.permute.xlu0 %274
        %v277 = vadd.f32 %v273, %v275
        %278 = vrot.lane.b32.xlu0 %v252, 100
        %v279 = vpop.permute.xlu0 %278
        %v281 = vadd.f32 %v277, %v279
        %282 = vrot.lane.b32.xlu0 %v252, 96
        %v283 = vpop.permute.xlu0 %282
        %v285 = vadd.f32 %v281, %v283
        %v286 = vadd.f32 %v285, 1e-09
        %v287 = vrsqrt.pop %v286
        %289 = vrot.lane.b32.xlu0 %v287, 4
        %v290 = vpop.permute.xlu0 %289
        %292 = vrot.lane.b32.xlu0 %v287, 8
        %v293 = vpop.permute.xlu0 %292
        %295 = vrot.lane.b32.xlu0 %v287, 12
        %v296 = vpop.permute.xlu0 %295
        %298 = vrot.lane.b32.xlu0 %v287, 16
        %v299 = vpop.permute.xlu0 %298
        %301 = vrot.lane.b32.xlu0 %v287, 20
        %v302 = vpop.permute.xlu0 %301
        %304 = vrot.lane.b32.xlu0 %v287, 24
        %v305 = vpop.permute.xlu0 %304
        %307 = vrot.lane.b32.xlu0 %v287, 28
        %v308 = vpop.permute.xlu0 %307
        %310 = vrot.lane.b32.xlu0 %v287, 32
        %v311 = vpop.permute.xlu0 %310
        %vm313 = vcmask 31744
        %v314 = vsel %vm313, %v287, %v290
        %vm315 = vcmask 64512
        %v316 = vsel %vm315, %v314, %v293
        %vm317 = vcmask 97280
        %v318 = vsel %vm317, %v316, %v296
        %vm319 = vcmask 130048
        %v320 = vsel %vm319, %v318, %v299
        %vm321 = vcmask 162816
        %v322 = vsel %vm321, %v320, %v302
        %vm323 = vcmask 195584
        %v324 = vsel %vm323, %v322, %v305
        %vm325 = vcmask 228352
        %v326 = vsel %vm325, %v324, %v308
        %vm327 = vcmask 261120
        %v328 = vsel %vm327, %v326, %v311
        %v329 = vlaneseq
        %v330 = vshrl.u32 %v329, 7
        %v331 = vsub.s32 0, %v330
        %v332 = vrot.slane %v328, %v331
        %v333 = vmul.f32 %v243, %v332
        %v334 = vpack.c.bf16 %v333, %v333
        %v335 = vld [vmem:[%s219] sm:$0x3f]
        %v337 = vcombine.high %v335, %v335
        %v339 = vunpack.c.l.s4 1983009808
        %v340 = vunpack.c.0.s8 %v339
        %v341 = vlaneseq
        %v342 = vshrl.u32 %v341, 7
        %v343 = vsub.s32 %v340, %v342
        %v344 = vrot.slane %v335, %v343
        %v346 = vunpack.c.l.s4 1983009808
        %v347 = vunpack.c.0.s8 %v346
        %v348 = vlaneseq
        %v349 = vshrl.u32 %v348, 7
        %v350 = vsub.s32 %v347, %v349
        %v351 = vrot.slane %v337, %v350
        %352 = vrot.lane.b32.xlu0 %v344, 90
        %v353 = vpop.permute.xlu0 %352
        %354 = vrot.lane.b32.xlu0 %v351, 90
        %v355 = vpop.permute.xlu0 %354
        %v356 = vrot.slane %v353, 4
        %v357 = vrot.slane %v355, 4
        %vm358 = vcmask 1043456
        %v359 = vsel %vm358, %v356, %v357
        %vm360 = vcmask 736256
        %v361 = vsel %vm360, %v353, %v359
        %364 = vst [vmem:[#allocation2] sm:$0x33] %v361
        %vm365 = vcmask 566272
        %366 = vst.msk [vmem:[#allocation2 + $0x8] sm:$0x3] %vm365, %v355
        %v367 = vcombine.low %v335, %v335
        %v369 = vunpack.c.l.s4 1983009808
        %v370 = vunpack.c.0.s8 %v369
        %v371 = vlaneseq
        %v372 = vshrl.u32 %v371, 7
        %v373 = vsub.s32 %v370, %v372
        %v374 = vrot.slane %v367, %v373
        %375 = vrot.lane.b32.xlu0 %v374, 91
        %v376 = vpop.permute.xlu0 %375
        %377 = vrot.lane.b32.xlu0 %v344, 91
        %v378 = vpop.permute.xlu0 %377
        %v379 = vrot.slane %v376, 4
        %v380 = vrot.slane %v378, 4
        %v381 = vsel %vm358, %v379, %v380
        %vm382 = vcmask 744448
        %v383 = vsel %vm382, %v376, %v381
        %386 = vst [vmem:[#allocation2] sm:$0xcc] %v383
        %vm387 = vcmask 568322
        %388 = vst.msk [vmem:[#allocation2 + $0x8] sm:$0xc] %vm387, %v378
        %389 = vrot.lane.b32.xlu0 %v344, 92
        %v390 = vpop.permute.xlu0 %389
        %391 = vrot.lane.b32.xlu0 %v351, 92
        %v392 = vpop.permute.xlu0 %391
        %v393 = vrot.slane %v390, 4
        %v394 = vrot.slane %v392, 4
        %v395 = vsel %vm358, %v393, %v394
        %vm396 = vcmask 752640
        %v397 = vsel %vm396, %v390, %v395
        %400 = vst [vmem:[#allocation2 + $0xc] sm:$0x33] %v397
        %401 = vst.msk [vmem:[#allocation2 + $0x14] sm:$0x3] %vm365, %v392
        %402 = vrot.lane.b32.xlu0 %v374, 108
        %v403 = vpop.permute.xlu0 %402
        %404 = vrot.lane.b32.xlu0 %v344, 108
        %v405 = vpop.permute.xlu0 %404
        %v406 = vrot.slane %v403, 4
        %v407 = vrot.slane %v405, 4
        %v408 = vsel %vm358, %v406, %v407
        %vm409 = vcmask 883712
        %v410 = vsel %vm409, %v403, %v408
        %413 = vst [vmem:[#allocation2 + $0xc] sm:$0xcc] %v410
        %414 = vst.msk [vmem:[#allocation2 + $0x14] sm:$0xc] %vm387, %v405
        %415 = vrot.lane.b32.xlu0 %v344, 109
        %v416 = vpop.permute.xlu0 %415
        %417 = vrot.lane.b32.xlu0 %v351, 109
        %v418 = vpop.permute.xlu0 %417
        %v419 = vrot.slane %v416, 4
        %v420 = vrot.slane %v418, 4
        %v421 = vsel %vm358, %v419, %v420
        %vm422 = vcmask 891904
        %v423 = vsel %vm422, %v416, %v421
        %426 = vst [vmem:[#allocation2 + $0x18] sm:$0x33] %v423
        %427 = vst.msk [vmem:[#allocation2 + $0x20] sm:$0x3] %vm365, %v418
        %428 = vrot.lane.b32.xlu0 %v374, 110
        %v429 = vpop.permute.xlu0 %428
        %430 = vrot.lane.b32.xlu0 %v344, 110
        %v431 = vpop.permute.xlu0 %430
        %v432 = vrot.slane %v429, 4
        %v433 = vrot.slane %v431, 4
        %v434 = vsel %vm358, %v432, %v433
        %vm435 = vcmask 900096
        %v436 = vsel %vm435, %v429, %v434
        %439 = vst [vmem:[#allocation2 + $0x18] sm:$0xcc] %v436
        %440 = vst.msk [vmem:[#allocation2 + $0x20] sm:$0xc] %vm387, %v431
        %441 = vrot.lane.b32.xlu0 %v344, 126
        %v442 = vpop.permute.xlu0 %441
        %443 = vrot.lane.b32.xlu0 %v351, 126
        %v444 = vpop.permute.xlu0 %443
        %v445 = vrot.slane %v442, 4
        %v446 = vrot.slane %v444, 4
        %v447 = vsel %vm358, %v445, %v446
        %vm448 = vcmask 1031168
        %v449 = vsel %vm448, %v442, %v447
        %452 = vst [vmem:[#allocation2 + $0x24] sm:$0x33] %v449
        %453 = vst.msk [vmem:[#allocation2 + $0x2c] sm:$0x3] %vm365, %v444
        %454 = vrot.lane.b32.xlu0 %v374, 127
        %v455 = vpop.permute.xlu0 %454
        %456 = vrot.lane.b32.xlu0 %v344, 127
        %v457 = vpop.permute.xlu0 %456
        %v458 = vrot.slane %v455, 4
        %v459 = vrot.slane %v457, 4
        %v460 = vsel %vm358, %v458, %v459
        %vm461 = vcmask 1039360
        %v462 = vsel %vm461, %v455, %v460
        %465 = vst [vmem:[#allocation2 + $0x24] sm:$0xcc] %v462
        %466 = vst.msk [vmem:[#allocation2 + $0x2c] sm:$0xc] %vm387, %v457
        %469 = vst [vmem:[#allocation2 + $0x30] sm:$0x33] %v344
        %470 = vst.msk [vmem:[#allocation2 + $0x38] sm:$0x3] %vm365, %v351
        %v471 = vld [vmem:[#allocation2] sm:$0xff]
        %v472 = vld [vmem:[#allocation2 + $0x8] sm:$0xf]
        %v473 = vld [vmem:[#allocation2 + $0xc] sm:$0xff]
        %v474 = vld [vmem:[#allocation2 + $0x14] sm:$0xf]
        %v475 = vld [vmem:[#allocation2 + $0x18] sm:$0xff]
        %v476 = vld [vmem:[#allocation2 + $0x20] sm:$0xf]
        %v477 = vld [vmem:[#allocation2 + $0x24] sm:$0xff]
        %v478 = vld [vmem:[#allocation2 + $0x2c] sm:$0xf]
        %v479 = vld [vmem:[#allocation2 + $0x30] sm:$0x33]
        %v480 = vld [vmem:[#allocation2 + $0x38] sm:$0x3]
        %v491 = vunpack.c.l.b16 %v471
        %v492 = vunpack.c.h.b16 %v471
        %v493 = vunpack.c.l.b16 %v472
        %v494 = vunpack.c.l.b16 %v473
        %v495 = vunpack.c.h.b16 %v473
        %v496 = vunpack.c.l.b16 %v474
        %v497 = vunpack.c.l.b16 %v475
        %v498 = vunpack.c.h.b16 %v475
        %v499 = vunpack.c.l.b16 %v476
        %v500 = vunpack.c.l.b16 %v477
        %v501 = vunpack.c.h.b16 %v477
        %v502 = vunpack.c.l.b16 %v478
        %v503 = vunpack.c.l.b16 %v479
        %v504 = vunpack.c.h.b16 %v479
        %v505 = vunpack.c.l.b16 %v480
        %v506 = vpack.c.b16 %v494, %v491
        %v507 = vpack.c.b16 %v495, %v492
        %v508 = vpack.c.b16 %v496, %v493
        %v509 = vpack.c.b16 %v500, %v497
        %v510 = vpack.c.b16 %v501, %v498
        %v511 = vpack.c.b16 %v502, %v499
        %v512 = vpack.c.b16 %v503, %v503
        %v513 = vpack.c.b16 %v504, %v504
        %v514 = vpack.c.b16 %v505, %v505
        %v522 = vsel %vm245, %v334, 0
        %vm524 = vcmask 1041408
        %v526 = vsel %vm524, %v512, 0
        %v529 = vsel %vm524, %v513, 0
        %v532 = vsel %vm524, %v514, 0
        %534 = vmatprep.subr.bf16.mxu0 %v507
        %535 = vmatpush1.bf16.msra.mxu0 %v506
        %536 = vmatprep.subr.bf16.mxu0 %v510
        %537 = vmatpush1.bf16.msra.mxu0 %v509
        %538 = vmatprep.subr.bf16.mxu0 %v529
        %539 = vmatpush1.bf16.msra.mxu0 %v526
        %540 = vmatprep.subr.bf16.mxu0 0
        %541 = vmatpush1.bf16.msra.mxu0 0
        %542 = vmatprep.subr.bf16.mxu0 0
        %543 = vmatpush1.bf16.msra.mxu0 0
        %544 = vmatprep.subr.bf16.mxu0 0
        %545 = vmatpush1.bf16.msra.mxu0 0
        %546 = vmatprep.subr.bf16.mxu0 0
        %547 = vmatpush1.bf16.msra.mxu0 0
        %548 = vmatprep.subr.bf16.mxu0 0
        %549 = vmatpush1.bf16.msra.mxu0 0
        %550 = vmatprep.subr.bf16.mxu0 0
        %551 = vmatpush1.bf16.msra.mxu0 0
        %552 = vmatprep.subr.bf16.mxu0 0
        %553 = vmatpush1.bf16.msra.mxu0 0
        %554 = vmatprep.subr.bf16.mxu0 0
        %555 = vmatpush1.bf16.msra.mxu0 0
        %556 = vmatprep.subr.bf16.mxu0 0
        %557 = vmatpush1.bf16.msra.mxu0 0
        %558 = vmatprep.subr.bf16.mxu0 0
        %559 = vmatpush1.bf16.msra.mxu0 0
        %560 = vmatprep.subr.bf16.mxu0 0
        %561 = vmatpush1.bf16.msra.mxu0 0
        %562 = vmatprep.subr.bf16.mxu0 0
        %563 = vmatpush1.bf16.msra.mxu0 0
        %564 = vmatprep.subr.bf16.mxu0 0
        %565 = vmatpush1.bf16.msra.mxu0 0
        %566 = vmatprep.mubr.bf16.mxu0 0
        %567 = vmatmul.mubr.bf16.gmra.mrb[0].mxu0 %v522
        %v568 = vpop.f32.mrb[0].mxu0
        %v569 = vadd.f32 0.0, %v568
        %v570 = vpop.f32.mrb[0].mxu0
        %v571 = vadd.f32 0.0, %v570
        %v572 = vpop.f32.mrb[0].mxu0
        %v573 = vpop.f32.mrb[0].mxu0
        %574 = vdwg.mxu0
        %575 = vmatprep.subr.bf16.mxu0 0
        %576 = vmatpush1.bf16.msra.mxu0 %v508
        %577 = vmatprep.subr.bf16.mxu0 0
        %578 = vmatpush1.bf16.msra.mxu0 %v511
        %579 = vmatprep.subr.bf16.mxu0 0
        %580 = vmatpush1.bf16.msra.mxu0 %v532
        %581 = vmatprep.subr.bf16.mxu0 0
        %582 = vmatpush1.bf16.msra.mxu0 0
        %583 = vmatprep.subr.bf16.mxu0 0
        %584 = vmatpush1.bf16.msra.mxu0 0
        %585 = vmatprep.subr.bf16.mxu0 0
        %586 = vmatpush1.bf16.msra.mxu0 0
        %587 = vmatprep.subr.bf16.mxu0 0
        %588 = vmatpush1.bf16.msra.mxu0 0
        %589 = vmatprep.subr.bf16.mxu0 0
        %590 = vmatpush1.bf16.msra.mxu0 0
        %591 = vmatprep.subr.bf16.mxu0 0
        %592 = vmatpush1.bf16.msra.mxu0 0
        %593 = vmatprep.subr.bf16.mxu0 0
        %594 = vmatpush1.bf16.msra.mxu0 0
        %595 = vmatprep.subr.bf16.mxu0 0
        %596 = vmatpush1.bf16.msra.mxu0 0
        %597 = vmatprep.subr.bf16.mxu0 0
        %598 = vmatpush1.bf16.msra.mxu0 0
        %599 = vmatprep.subr.bf16.mxu0 0
        %600 = vmatpush1.bf16.msra.mxu0 0
        %601 = vmatprep.subr.bf16.mxu0 0
        %602 = vmatpush1.bf16.msra.mxu0 0
        %603 = vmatprep.subr.bf16.mxu0 0
        %604 = vmatpush1.bf16.msra.mxu0 0
        %605 = vmatprep.subr.bf16.mxu0 0
        %606 = vmatpush1.bf16.msra.mxu0 0
        %607 = vmatprep.mubr.bf16.mxu0 0
        %608 = vmatmul.mubr.bf16.gmra.mrb[0].mxu0 %v522
        %v609 = vpop.f32.mrb[0].mxu0
        %v610 = vadd.f32 0.0, %v609
        %v611 = vpop.f32.mrb[0].mxu0
        %v612 = vpop.f32.mrb[0].mxu0
        %v613 = vpop.f32.mrb[0].mxu0
        %614 = vdwg.mxu0
        %615 = vst [vmem:[%s214] sm:$0xff] %v569
        %616 = vst [vmem:[%s214 + $0x8] sm:$0xff] %v571
        %vm617 = vcmask 556032
        %618 = vst.msk [vmem:[%s214 + $0x10] sm:$0xff] %vm617, %v610
        %s619 = sand.u32 %s125, 1
        %s620 = scalar_lea.sflag [#allocation4], %s619
        %s621 = sand.u32 %s125, 1
        %s622 = smul.addr %s621, 24
        %s623 = scalar_lea.vmem [#allocation3], %s622
        // Predicated region
        $region37: #{tpu_custom_call.1} parent=35 // pred_check
          %p624 = pneg %p135
        $region38: #{tpu_custom_call.1} parent=35 // pred_check_branch
          %626 = sbr.rel (%p624) target = $region40
        $region39: #{tpu_custom_call.1} parent=35 // pred_region
          %s628 = ssub.s32 384, 384
          %629 = vsyncadd %s620, %s628
          %s630 = smul.addr %s18, 3
          %s631 = smul.addr %s630, 128
          %s632 = scalar_lea.hbm %s4, %s631
          %s634 = sshll.u32 %s623, 4
          %s635 = int_to_ptr.vmem [resolvable:$true] %s634
          %637 = dma.vmem_to_hbm [thread:$0]  %s635, 384, %s632, %s620
        $region40: #{tpu_custom_call.1} parent=35 // pred_fallthru
          _
      $region36: #{tpu_custom_call.1} parent=5 // pred_fallthru
        _
      %p638 = scmp.le.s32.totalorder 2, %s13
      // Predicated region
      $region41: #{tpu_custom_call.1} parent=5 // pred_check
        %p639 = pneg %p638
      $region42: #{tpu_custom_call.1} parent=5 // pred_check_branch
        %641 = sbr.rel (%p639) target = $region44
      $region43: #{tpu_custom_call.1} parent=5 // pred_region
        %s642 = ssub.s32 %s13, 2
        // Predicated region
        $region45: #{tpu_custom_call.1} parent=43 // pred_check
          %p643 = pneg %p141
        $region46: #{tpu_custom_call.1} parent=43 // pred_check_branch
          %645 = sbr.rel (%p643) target = $region48
        $region47: #{tpu_custom_call.1} parent=43 // pred_region
          %s646 = sand.u32 %s126, 1
          %s647 = scalar_lea.sflag [#allocation4], %s646
          %s648 = sand.u32 %s126, 1
          %s649 = smul.addr %s648, 24
          %s650 = scalar_lea.vmem [#allocation3], %s649
          %651 = dma.done %s647, 384
        $region48: #{tpu_custom_call.1} parent=43 // pred_fallthru
          _
      $region44: #{tpu_custom_call.1} parent=5 // pred_fallthru
        _
    $region6: #{tpu_custom_call.1} parent=1 // loop_footer
      %s17 = sadd.s32 1, %s13
    $region7: #{tpu_custom_call.1} parent=1 // loop_footer_branch
      %12 = sbr.rel target = $region3
    $region8: #{tpu_custom_call.1} parent=1 // loop_exit
      _
    %652 = vsyncpa [#allocation4], 1
    %s653 = scalar_lea.sflag [#allocation4], 1
    %654 = vsyncpa %s653, 1

</llo_original>
